<compile_context>
chip_gen: v5e
topology: v5e:2x2
jax: 0.10.0
libtpu: 0.0.40
codegen_flags: <defaults>
</compile_context>

<pallas_src>
import jax
import jax.numpy as jnp
from jax.experimental import pallas as pl
from jax.experimental.pallas import tpu as pltpu


def mlp_kernel(x_ref, w1_ref, b1_ref, w2_ref, b2_ref,
               w3_ref, b3_ref, w4_ref, b4_ref, o_ref):
    def dense(a, w_ref, b_ref):
        # MXU matmul in the weights' dtype (f32 or bf16); f32 accumulation.
        return jnp.dot(a.astype(w_ref.dtype), w_ref[...],
                       preferred_element_type=jnp.float32) + b_ref[...]

    h = jnp.maximum(dense(x_ref[...], w1_ref, b1_ref), 0.0)   # BN folded in
    h = jnp.maximum(dense(h, w2_ref, b2_ref), 0.0)
    h = jnp.maximum(dense(h, w3_ref, b3_ref), 0.0)
    z = dense(h, w4_ref, b4_ref)

    # Sigmoid (EUP exp).  Exact reciprocal to match the f32 reference tightly.
    o_ref[...] = jax.nn.sigmoid(z).astype(o_ref.dtype)


def model_forward(x, params, *, tile_b=1024, compute_dtype=jnp.float32,
                  eps=1e-5):
    """x: (B, D) float32.  params: dict of gamma, beta, (w, b) per layer."""
    B, D = x.shape

    # Tile size: multiple of 8 sublanes, capped at B (full-dim block if small).
    tile_b = min(tile_b, B)
    if tile_b != B:
        tile_b = max(8, (tile_b // 8) * 8)

    # --- BatchNorm1d statistics over the *whole* batch (wrapper-side XLA) ---
    xf = x.astype(jnp.float32)
    mean = jnp.mean(xf, axis=0, keepdims=True)                     # (1, D)
    var = jnp.mean(jnp.square(xf - mean), axis=0, keepdims=True)   # biased
    scale = params["gamma"] * jax.lax.rsqrt(var + eps)             # (1, D)
    shift = params["beta"] - mean * scale                          # (1, D)

    # --- Fold BN (normalize + affine) into the first Linear ---
    w1 = scale.reshape(D, 1) * params["w1"]                        # (D, 64)
    b1 = params["b1"] + shift @ params["w1"]                       # (1, 64)

    cd = compute_dtype
    args = (
        x,                                                   # kernel-side cast
        w1.astype(cd), b1.astype(jnp.float32),
        params["w2"].astype(cd), params["b2"].astype(jnp.float32),
        params["w3"].astype(cd), params["b3"].astype(jnp.float32),
        params["w4"].astype(cd), params["b4"].astype(jnp.float32),
    )

    def full_block(shape):
        # Whole-array VMEM block; constant index_map -> stays resident.
        return pl.BlockSpec(shape, lambda i, _n=len(shape): (0,) * _n)

    in_specs = [
        pl.BlockSpec((tile_b, D), lambda i: (i, 0)),   # streamed x tiles
        full_block(w1.shape), full_block(b1.shape),
        full_block(params["w2"].shape), full_block(params["b2"].shape),
        full_block(params["w3"].shape), full_block(params["b3"].shape),
        full_block(params["w4"].shape), full_block(params["b4"].shape),
    ]
    out_specs = pl.BlockSpec((tile_b, 1), lambda i: (i, 0))

    return pl.pallas_call(
        mlp_kernel,
        out_shape=jax.ShapeDtypeStruct((B, 1), jnp.float32),
        grid=(pl.cdiv(B, tile_b),),
        in_specs=in_specs,
        out_specs=out_specs,
        compiler_params=pltpu.CompilerParams(
            dimension_semantics=("parallel",),        # megacore on v7x
            vmem_limit_bytes=32 * 1024 * 1024,        # safe on v5e/v6e/v7x
        ),
    )(*args)


def init_params(input_dim, key):
    ks = jax.random.split(key, 4)

    def lin(k, fan_in, fan_out):
        kw, kb = jax.random.split(k)
        bound = 1.0 / jnp.sqrt(fan_in)
        w = jax.random.uniform(kw, (fan_in, fan_out), jnp.float32, -bound, bound)
        b = jax.random.uniform(kb, (1, fan_out), jnp.float32, -bound, bound)
        return w, b

    w1, b1 = lin(ks[0], input_dim, 64)
    w2, b2 = lin(ks[1], 64, 32)
    w3, b3 = lin(ks[2], 32, 16)
    w4, b4 = lin(ks[3], 16, 1)
    return {
        "gamma": jnp.ones((1, input_dim), jnp.float32),   # BatchNorm weight
        "beta": jnp.zeros((1, input_dim), jnp.float32),   # BatchNorm bias
        "w1": w1, "b1": b1,
        "w2": w2, "b2": b2,
        "w3": w3, "b3": b3,
        "w4": w4, "b4": b4,
    }


def _reference(x, p):
    # Pure-JAX reference matching the PyTorch module (training-mode BN).
    mean = jnp.mean(x, axis=0, keepdims=True)
    var = jnp.mean((x - mean) ** 2, axis=0, keepdims=True)
    h = (x - mean) / jnp.sqrt(var + 1e-5) * p["gamma"] + p["beta"]
    h = jax.nn.relu(h @ p["w1"] + p["b1"])
    h = jax.nn.relu(h @ p["w2"] + p["b2"])
    h = jax.nn.relu(h @ p["w3"] + p["b3"])
    return jax.nn.sigmoid(h @ p["w4"] + p["b4"])


if __name__ == "__main__":
    key = jax.random.PRNGKey(0)
    k_x, k_p = jax.random.split(key)

    batch, input_dim = 64, 32            # small shapes; 4 grid steps @ tile_b=16
    x = jax.random.normal(k_x, (batch, input_dim), jnp.float32)
    params = init_params(input_dim, k_p)
    ref = _reference(x, params)

    # f32 path: tight parity with the PyTorch forward.
    out = model_forward(x, params, tile_b=16, compute_dtype=jnp.float32)
    jax.block_until_ready(out)
    assert out.shape == (batch, 1)
    assert jnp.allclose(out, ref, atol=1e-4, rtol=1e-4), "f32 mismatch"

    # bf16 weight path (v6e/v7x hot path); f32 accumulation keeps error small.
    out_bf16 = model_forward(x, params, tile_b=16, compute_dtype=jnp.bfloat16)
    jax.block_until_ready(out_bf16)
    assert jnp.allclose(out_bf16, ref, atol=3e-2, rtol=3e-2), "bf16 mismatch"

    print("KERNEL_OK")
</pallas_src>

<mosaic_0001>
module attributes {stable_mosaic.version = 11 : i64} {
  func.func @mlp_kernel(%arg0: i32, %arg1: memref<16x32xf32, #tpu.memory_space<vmem>>, %arg2: memref<32x64xf32, #tpu.memory_space<vmem>>, %arg3: memref<1x64xf32, #tpu.memory_space<vmem>>, %arg4: memref<64x32xf32, #tpu.memory_space<vmem>>, %arg5: memref<1x32xf32, #tpu.memory_space<vmem>>, %arg6: memref<32x16xf32, #tpu.memory_space<vmem>>, %arg7: memref<1x16xf32, #tpu.memory_space<vmem>>, %arg8: memref<16x1xf32, #tpu.memory_space<vmem>>, %arg9: memref<1x1xf32, #tpu.memory_space<vmem>>, %arg10: memref<16x1xf32, #tpu.memory_space<vmem>>) attributes {dimension_semantics = [#tpu.dimension_semantics<parallel>], iteration_bounds = array<i64: 4>, scalar_prefetch = 0 : i64, scratch_operands = 0 : i64, tpu.core_type = #tpu.core_type<tc>, window_params = [{transform_indices = @transform_0, window_bounds = array<i64: 16, 32>}, {pipeline_mode = #tpu.pipeline_mode<synchronous>, transform_indices = @transform_1, window_bounds = array<i64: 32, 64>}, {pipeline_mode = #tpu.pipeline_mode<synchronous>, transform_indices = @transform_2, window_bounds = array<i64: 1, 64>}, {pipeline_mode = #tpu.pipeline_mode<synchronous>, transform_indices = @transform_3, window_bounds = array<i64: 64, 32>}, {pipeline_mode = #tpu.pipeline_mode<synchronous>, transform_indices = @transform_4, window_bounds = array<i64: 1, 32>}, {pipeline_mode = #tpu.pipeline_mode<synchronous>, transform_indices = @transform_5, window_bounds = array<i64: 32, 16>}, {pipeline_mode = #tpu.pipeline_mode<synchronous>, transform_indices = @transform_6, window_bounds = array<i64: 1, 16>}, {pipeline_mode = #tpu.pipeline_mode<synchronous>, transform_indices = @transform_7, window_bounds = array<i64: 16, 1>}, {pipeline_mode = #tpu.pipeline_mode<synchronous>, transform_indices = @transform_8, window_bounds = array<i64: 1, 1>}, {transform_indices = @transform_9, window_bounds = array<i64: 16, 1>}]} {
    %c0 = arith.constant 0 : index
    %c0_0 = arith.constant 0 : index
    %0 = vector.load %arg1[%c0, %c0_0] : memref<16x32xf32, #tpu.memory_space<vmem>>, vector<16x32xf32>
    %c0_1 = arith.constant 0 : index
    %c0_2 = arith.constant 0 : index
    %1 = vector.load %arg2[%c0_1, %c0_2] : memref<32x64xf32, #tpu.memory_space<vmem>>, vector<32x64xf32>
    %cst = arith.constant dense<0.000000e+00> : vector<16x64xf32>
    %2 = tpu.matmul %0, %1, %cst {dimension_numbers = #tpu.dot_dimension_numbers<[1], [0], [0], [1], [0, 0, 1, 1], [], []>} : vector<16x32xf32>, vector<32x64xf32>, vector<16x64xf32> -> vector<16x64xf32>
    %c0_3 = arith.constant 0 : index
    %c0_4 = arith.constant 0 : index
    %3 = vector.load %arg3[%c0_3, %c0_4] : memref<1x64xf32, #tpu.memory_space<vmem>>, vector<1x64xf32>
    %4 = vector.broadcast %3 : vector<1x64xf32> to vector<16x64xf32>
    %5 = arith.addf %2, %4 : vector<16x64xf32>
    %cst_5 = arith.constant 0.000000e+00 : f32
    %6 = vector.broadcast %cst_5 : f32 to vector<16x64xf32>
    %7 = arith.maximumf %5, %6 : vector<16x64xf32>
    %c0_6 = arith.constant 0 : index
    %c0_7 = arith.constant 0 : index
    %8 = vector.load %arg4[%c0_6, %c0_7] : memref<64x32xf32, #tpu.memory_space<vmem>>, vector<64x32xf32>
    %cst_8 = arith.constant dense<0.000000e+00> : vector<16x32xf32>
    %9 = tpu.matmul %7, %8, %cst_8 {dimension_numbers = #tpu.dot_dimension_numbers<[1], [0], [0], [1], [0, 0, 1, 1], [], []>} : vector<16x64xf32>, vector<64x32xf32>, vector<16x32xf32> -> vector<16x32xf32>
    %c0_9 = arith.constant 0 : index
    %c0_10 = arith.constant 0 : index
    %10 = vector.load %arg5[%c0_9, %c0_10] : memref<1x32xf32, #tpu.memory_space<vmem>>, vector<1x32xf32>
    %11 = vector.broadcast %10 : vector<1x32xf32> to vector<16x32xf32>
    %12 = arith.addf %9, %11 : vector<16x32xf32>
    %cst_11 = arith.constant 0.000000e+00 : f32
    %13 = vector.broadcast %cst_11 : f32 to vector<16x32xf32>
    %14 = arith.maximumf %12, %13 : vector<16x32xf32>
    %c0_12 = arith.constant 0 : index
    %c0_13 = arith.constant 0 : index
    %15 = vector.load %arg6[%c0_12, %c0_13] : memref<32x16xf32, #tpu.memory_space<vmem>>, vector<32x16xf32>
    %cst_14 = arith.constant dense<0.000000e+00> : vector<16x16xf32>
    %16 = tpu.matmul %14, %15, %cst_14 {dimension_numbers = #tpu.dot_dimension_numbers<[1], [0], [0], [1], [0, 0, 1, 1], [], []>} : vector<16x32xf32>, vector<32x16xf32>, vector<16x16xf32> -> vector<16x16xf32>
    %c0_15 = arith.constant 0 : index
    %c0_16 = arith.constant 0 : index
    %17 = vector.load %arg7[%c0_15, %c0_16] : memref<1x16xf32, #tpu.memory_space<vmem>>, vector<1x16xf32>
    %18 = vector.broadcast %17 : vector<1x16xf32> to vector<16x16xf32>
    %19 = arith.addf %16, %18 : vector<16x16xf32>
    %cst_17 = arith.constant 0.000000e+00 : f32
    %20 = vector.broadcast %cst_17 : f32 to vector<16x16xf32>
    %21 = arith.maximumf %19, %20 : vector<16x16xf32>
    %c0_18 = arith.constant 0 : index
    %c0_19 = arith.constant 0 : index
    %22 = vector.load %arg8[%c0_18, %c0_19] : memref<16x1xf32, #tpu.memory_space<vmem>>, vector<16x1xf32>
    %cst_20 = arith.constant dense<0.000000e+00> : vector<16x1xf32>
    %23 = tpu.matmul %21, %22, %cst_20 {dimension_numbers = #tpu.dot_dimension_numbers<[1], [0], [0], [1], [0, 0, 1, 1], [], []>} : vector<16x16xf32>, vector<16x1xf32>, vector<16x1xf32> -> vector<16x1xf32>
    %c0_21 = arith.constant 0 : index
    %c0_22 = arith.constant 0 : index
    %24 = vector.load %arg9[%c0_21, %c0_22] : memref<1x1xf32, #tpu.memory_space<vmem>>, vector<1x1xf32>
    %25 = vector.broadcast %24 : vector<1x1xf32> to vector<16x1xf32>
    %26 = arith.addf %23, %25 : vector<16x1xf32>
    %27 = arith.negf %26 : vector<16x1xf32>
    %28 = math.exp %27 : vector<16x1xf32>
    %cst_23 = arith.constant 1.000000e+00 : f32
    %29 = vector.broadcast %cst_23 : f32 to vector<16x1xf32>
    %30 = arith.addf %29, %28 : vector<16x1xf32>
    %31 = arith.divf %29, %30 : vector<16x1xf32>
    %c0_24 = arith.constant 0 : index
    %c0_25 = arith.constant 0 : index
    %32 = vector.load %arg10[%c0_24, %c0_25] : memref<16x1xf32, #tpu.memory_space<vmem>>, vector<16x1xf32>
    tpu.vector_store %arg10[%c0_24, %c0_25], %31 {strides = array<i32>} : memref<16x1xf32, #tpu.memory_space<vmem>>, vector<16x1xf32>,
    return
  }
  func.func @transform_0(%arg0: i32) -> (i32, i32) {
    %c0_i32 = arith.constant 0 : i32
    %c0_i32_0 = arith.constant 0 : i32
    return %arg0, %c0_i32 : i32, i32
  }
  func.func @transform_1(%arg0: i32) -> (i32, i32) {
    %c0_i32 = arith.constant 0 : i32
    %c0_i32_0 = arith.constant 0 : i32
    %c0_i32_1 = arith.constant 0 : i32
    return %c0_i32, %c0_i32_0 : i32, i32
  }
  func.func @transform_2(%arg0: i32) -> (i32, i32) {
    %c0_i32 = arith.constant 0 : i32
    %c0_i32_0 = arith.constant 0 : i32
    %c0_i32_1 = arith.constant 0 : i32
    return %c0_i32, %c0_i32_0 : i32, i32
  }
  func.func @transform_3(%arg0: i32) -> (i32, i32) {
    %c0_i32 = arith.constant 0 : i32
    %c0_i32_0 = arith.constant 0 : i32
    %c0_i32_1 = arith.constant 0 : i32
    return %c0_i32, %c0_i32_0 : i32, i32
  }
  func.func @transform_4(%arg0: i32) -> (i32, i32) {
    %c0_i32 = arith.constant 0 : i32
    %c0_i32_0 = arith.constant 0 : i32
    %c0_i32_1 = arith.constant 0 : i32
    return %c0_i32, %c0_i32_0 : i32, i32
  }
  func.func @transform_5(%arg0: i32) -> (i32, i32) {
    %c0_i32 = arith.constant 0 : i32
    %c0_i32_0 = arith.constant 0 : i32
    %c0_i32_1 = arith.constant 0 : i32
    return %c0_i32, %c0_i32_0 : i32, i32
  }
  func.func @transform_6(%arg0: i32) -> (i32, i32) {
    %c0_i32 = arith.constant 0 : i32
    %c0_i32_0 = arith.constant 0 : i32
    %c0_i32_1 = arith.constant 0 : i32
    return %c0_i32, %c0_i32_0 : i32, i32
  }
  func.func @transform_7(%arg0: i32) -> (i32, i32) {
    %c0_i32 = arith.constant 0 : i32
    %c0_i32_0 = arith.constant 0 : i32
    %c0_i32_1 = arith.constant 0 : i32
    return %c0_i32, %c0_i32_0 : i32, i32
  }
  func.func @transform_8(%arg0: i32) -> (i32, i32) {
    %c0_i32 = arith.constant 0 : i32
    %c0_i32_0 = arith.constant 0 : i32
    %c0_i32_1 = arith.constant 0 : i32
    return %c0_i32, %c0_i32_0 : i32, i32
  }
  func.func @transform_9(%arg0: i32) -> (i32, i32) {
    %c0_i32 = arith.constant 0 : i32
    %c0_i32_0 = arith.constant 0 : i32
    return %arg0, %c0_i32 : i32, i32
  }
}

</mosaic_0001>

<llo_original>
// kernel: tpu_custom_call.1
$region0: #{tpu_custom_call.1}
  #allocation0 [shape = 'u32[]', space=smem, size = 0x4, offset = 0x4, fixed_abs, tag = 'smem constant byte address 0x4 - core index']
  #allocation1 [shape = 'u32[72,128]{1,0:T(1,128)}', space=vmem, size = 0x9000, scoped, tag = 'internal scratch']
  #allocation2 [shape = 'f32[1,1]{1,0:T(1,128)S(1)}', space=vmem, size = 0x200, scoped, tag = 'scoped memory for tpu_custom_call.1']
  %s0 = inlined_call_operand.vmem [shape: f32[64,32], index: 0, kind: input, shape index: {}]
  %s1 = inlined_call_operand.vmem [shape: f32[32,64], index: 1, kind: input, shape index: {}]
  %s2 = inlined_call_operand.vmem [shape: f32[1,64], index: 2, kind: input, shape index: {}]
  %s3 = inlined_call_operand.vmem [shape: f32[64,32], index: 3, kind: input, shape index: {}]
  %s4 = inlined_call_operand.vmem [shape: f32[1,32], index: 4, kind: input, shape index: {}]
  %s5 = inlined_call_operand.vmem [shape: f32[32,16], index: 5, kind: input, shape index: {}]
  %s6 = inlined_call_operand.vmem [shape: f32[1,16], index: 6, kind: input, shape index: {}]
  %s7 = inlined_call_operand.vmem [shape: f32[16,1], index: 7, kind: input, shape index: {}]
  %s8 = inlined_call_operand.<no memory space> [shape: f32[1,1], index: 8, kind: input, shape index: {}]
  %s9 = inlined_call_operand.vmem [shape: f32[64,1], index: 9, kind: output, shape index: {}]
  %s10 = sld [smem:[#allocation0]]
  $region69: #{tpu_custom_call.1} parent=0
    _
  %s12 = ssub.s32 1, %s10
  %s13 = scalar_select 0, %s12, %s10
  %v14 = vstv %s8
  %15 = vst [vmem:[#allocation2] sm:$0x1] %v14
  loop: start=0, step=1, limit=6
  $region2: #{tpu_custom_call.1} parent=0 // loop_pre_header
    _
  $region3: #{tpu_custom_call.1} parent=0 // loop_header
    %s17 = sphi 0, %s21
    %p18 = scmp.ge.s32.totalorder %s17, 6
    %s27 = sphi 0, %s29
    %s30 = sphi 0, %s27
    %s31 = sphi 0, %s30
    %s47 = sphi 0, %s31
    %s51 = sphi 0, %s51
    %s53 = sphi 0, %s51
    %s54 = sphi 0, %s53
    %s68 = sphi 0, %s54
    %s72 = sphi 0, %s72
    %s74 = sphi 0, %s72
    %s75 = sphi 0, %s74
    %s89 = sphi 0, %s75
    %s93 = sphi 0, %s93
    %s95 = sphi 0, %s93
    %s96 = sphi 0, %s95
    %s110 = sphi 0, %s96
    %s114 = sphi 0, %s114
    %s116 = sphi 0, %s114
    %s117 = sphi 0, %s116
    %s131 = sphi 0, %s117
    %s135 = sphi 0, %s135
    %s137 = sphi 0, %s135
    %s138 = sphi 0, %s137
    %s152 = sphi 0, %s138
    %s156 = sphi 0, %s156
    %s158 = sphi 0, %s156
    %s159 = sphi 0, %s158
    %s173 = sphi 0, %s159
    %s177 = sphi 0, %s177
    %s179 = sphi 0, %s177
    %s180 = sphi 0, %s179
    %s194 = sphi 0, %s180
    %s198 = sphi 0, %s198
    %s200 = sphi 0, %s198
    %s201 = sphi 0, %s200
    %s215 = sphi 0, %s201
    %s221 = sphi 0, %s223
    %s224 = sphi 0, %s221
    %s225 = sphi 0, %s224
    %s241 = sphi 0, %s225
  $region4: #{tpu_custom_call.1} parent=0 // loop_header_branch
    %20 = sbr.rel (%p18) target = $region8
  $region5: #{tpu_custom_call.1} parent=0 // loop_body
    %s22 = ssub.s32 %s17, 1
    %s23 = ssub.s32 %s17, 2
    %s24 = sadd.s32 %s17, 1
    %s25 = ssub.s32 %s17, %s24
    %p26 = scmp.eq.s32.totalorder %s25, 0
    %s28 = sadd.s32 %s27, 1
    %s29 = scalar_select %p26, %s27, %s28
    %p32 = pneg %p26
    %p33 = scmp.eq.s32.totalorder %s17, 3
    %p34 = por %p32, %p33
    %p35 = scmp.ne.s32.totalorder %s27, %s30
    %p36 = scmp.eq.s32.totalorder %s17, 0
    %p37 = por %p35, %p36
    %p38 = scmp.ne.s32.totalorder %s27, %s30
    %p39 = scmp.eq.s32.totalorder %s22, 3
    %p40 = por %p38, %p39
    %p41 = scmp.ne.s32.totalorder %s30, %s31
    %p42 = scmp.eq.s32.totalorder %s22, 0
    %p43 = por %p41, %p42
    %p44 = scmp.ne.s32.totalorder %s30, %s31
    %p45 = scmp.eq.s32.totalorder %s23, 3
    %p46 = por %p44, %p45
    %p48 = scmp.ne.s32.totalorder %s31, %s47
    %p49 = scmp.eq.s32.totalorder %s23, 0
    %p50 = por %p48, %p49
    %s52 = sadd.s32 %s51, 1
    %p55 = scmp.eq.s32.totalorder %s17, 3
    %p56 = scmp.ne.s32.totalorder %s51, %s53
    %p57 = scmp.eq.s32.totalorder %s17, 0
    %p58 = por %p56, %p57
    %p59 = scmp.ne.s32.totalorder %s51, %s53
    %p60 = scmp.eq.s32.totalorder %s22, 3
    %p61 = por %p59, %p60
    %p62 = scmp.ne.s32.totalorder %s53, %s54
    %p63 = scmp.eq.s32.totalorder %s22, 0
    %p64 = por %p62, %p63
    %p65 = scmp.ne.s32.totalorder %s53, %s54
    %p66 = scmp.eq.s32.totalorder %s23, 3
    %p67 = por %p65, %p66
    %p69 = scmp.ne.s32.totalorder %s54, %s68
    %p70 = scmp.eq.s32.totalorder %s23, 0
    %p71 = por %p69, %p70
    %s73 = sadd.s32 %s72, 1
    %p76 = scmp.eq.s32.totalorder %s17, 3
    %p77 = scmp.ne.s32.totalorder %s72, %s74
    %p78 = scmp.eq.s32.totalorder %s17, 0
    %p79 = por %p77, %p78
    %p80 = scmp.ne.s32.totalorder %s72, %s74
    %p81 = scmp.eq.s32.totalorder %s22, 3
    %p82 = por %p80, %p81
    %p83 = scmp.ne.s32.totalorder %s74, %s75
    %p84 = scmp.eq.s32.totalorder %s22, 0
    %p85 = por %p83, %p84
    %p86 = scmp.ne.s32.totalorder %s74, %s75
    %p87 = scmp.eq.s32.totalorder %s23, 3
    %p88 = por %p86, %p87
    %p90 = scmp.ne.s32.totalorder %s75, %s89
    %p91 = scmp.eq.s32.totalorder %s23, 0
    %p92 = por %p90, %p91
    %s94 = sadd.s32 %s93, 1
    %p97 = scmp.eq.s32.totalorder %s17, 3
    %p98 = scmp.ne.s32.totalorder %s93, %s95
    %p99 = scmp.eq.s32.totalorder %s17, 0
    %p100 = por %p98, %p99
    %p101 = scmp.ne.s32.totalorder %s93, %s95
    %p102 = scmp.eq.s32.totalorder %s22, 3
    %p103 = por %p101, %p102
    %p104 = scmp.ne.s32.totalorder %s95, %s96
    %p105 = scmp.eq.s32.totalorder %s22, 0
    %p106 = por %p104, %p105
    %p107 = scmp.ne.s32.totalorder %s95, %s96
    %p108 = scmp.eq.s32.totalorder %s23, 3
    %p109 = por %p107, %p108
    %p111 = scmp.ne.s32.totalorder %s96, %s110
    %p112 = scmp.eq.s32.totalorder %s23, 0
    %p113 = por %p111, %p112
    %s115 = sadd.s32 %s114, 1
    %p118 = scmp.eq.s32.totalorder %s17, 3
    %p119 = scmp.ne.s32.totalorder %s114, %s116
    %p120 = scmp.eq.s32.totalorder %s17, 0
    %p121 = por %p119, %p120
    %p122 = scmp.ne.s32.totalorder %s114, %s116
    %p123 = scmp.eq.s32.totalorder %s22, 3
    %p124 = por %p122, %p123
    %p125 = scmp.ne.s32.totalorder %s116, %s117
    %p126 = scmp.eq.s32.totalorder %s22, 0
    %p127 = por %p125, %p126
    %p128 = scmp.ne.s32.totalorder %s116, %s117
    %p129 = scmp.eq.s32.totalorder %s23, 3
    %p130 = por %p128, %p129
    %p132 = scmp.ne.s32.totalorder %s117, %s131
    %p133 = scmp.eq.s32.totalorder %s23, 0
    %p134 = por %p132, %p133
    %s136 = sadd.s32 %s135, 1
    %p139 = scmp.eq.s32.totalorder %s17, 3
    %p140 = scmp.ne.s32.totalorder %s135, %s137
    %p141 = scmp.eq.s32.totalorder %s17, 0
    %p142 = por %p140, %p141
    %p143 = scmp.ne.s32.totalorder %s135, %s137
    %p144 = scmp.eq.s32.totalorder %s22, 3
    %p145 = por %p143, %p144
    %p146 = scmp.ne.s32.totalorder %s137, %s138
    %p147 = scmp.eq.s32.totalorder %s22, 0
    %p148 = por %p146, %p147
    %p149 = scmp.ne.s32.totalorder %s137, %s138
    %p150 = scmp.eq.s32.totalorder %s23, 3
    %p151 = por %p149, %p150
    %p153 = scmp.ne.s32.totalorder %s138, %s152
    %p154 = scmp.eq.s32.totalorder %s23, 0
    %p155 = por %p153, %p154
    %s157 = sadd.s32 %s156, 1
    %p160 = scmp.eq.s32.totalorder %s17, 3
    %p161 = scmp.ne.s32.totalorder %s156, %s158
    %p162 = scmp.eq.s32.totalorder %s17, 0
    %p163 = por %p161, %p162
    %p164 = scmp.ne.s32.totalorder %s156, %s158
    %p165 = scmp.eq.s32.totalorder %s22, 3
    %p166 = por %p164, %p165
    %p167 = scmp.ne.s32.totalorder %s158, %s159
    %p168 = scmp.eq.s32.totalorder %s22, 0
    %p169 = por %p167, %p168
    %p170 = scmp.ne.s32.totalorder %s158, %s159
    %p171 = scmp.eq.s32.totalorder %s23, 3
    %p172 = por %p170, %p171
    %p174 = scmp.ne.s32.totalorder %s159, %s173
    %p175 = scmp.eq.s32.totalorder %s23, 0
    %p176 = por %p174, %p175
    %s178 = sadd.s32 %s177, 1
    %p181 = scmp.eq.s32.totalorder %s17, 3
    %p182 = scmp.ne.s32.totalorder %s177, %s179
    %p183 = scmp.eq.s32.totalorder %s17, 0
    %p184 = por %p182, %p183
    %p185 = scmp.ne.s32.totalorder %s177, %s179
    %p186 = scmp.eq.s32.totalorder %s22, 3
    %p187 = por %p185, %p186
    %p188 = scmp.ne.s32.totalorder %s179, %s180
    %p189 = scmp.eq.s32.totalorder %s22, 0
    %p190 = por %p188, %p189
    %p191 = scmp.ne.s32.totalorder %s179, %s180
    %p192 = scmp.eq.s32.totalorder %s23, 3
    %p193 = por %p191, %p192
    %p195 = scmp.ne.s32.totalorder %s180, %s194
    %p196 = scmp.eq.s32.totalorder %s23, 0
    %p197 = por %p195, %p196
    %s199 = sadd.s32 %s198, 1
    %p202 = scmp.eq.s32.totalorder %s17, 3
    %p203 = scmp.ne.s32.totalorder %s198, %s200
    %p204 = scmp.eq.s32.totalorder %s17, 0
    %p205 = por %p203, %p204
    %p206 = scmp.ne.s32.totalorder %s198, %s200
    %p207 = scmp.eq.s32.totalorder %s22, 3
    %p208 = por %p206, %p207
    %p209 = scmp.ne.s32.totalorder %s200, %s201
    %p210 = scmp.eq.s32.totalorder %s22, 0
    %p211 = por %p209, %p210
    %p212 = scmp.ne.s32.totalorder %s200, %s201
    %p213 = scmp.eq.s32.totalorder %s23, 3
    %p214 = por %p212, %p213
    %p216 = scmp.ne.s32.totalorder %s201, %s215
    %p217 = scmp.eq.s32.totalorder %s23, 0
    %p218 = por %p216, %p217
    %s219 = ssub.s32 %s17, %s24
    %p220 = scmp.eq.s32.totalorder %s219, 0
    %s222 = sadd.s32 %s221, 1
    %s223 = scalar_select %p220, %s221, %s222
    %p226 = pneg %p220
    %p227 = scmp.eq.s32.totalorder %s17, 3
    %p228 = por %p226, %p227
    %p229 = scmp.ne.s32.totalorder %s221, %s224
    %p230 = scmp.eq.s32.totalorder %s17, 0
    %p231 = por %p229, %p230
    %p232 = scmp.ne.s32.totalorder %s221, %s224
    %p233 = scmp.eq.s32.totalorder %s22, 3
    %p234 = por %p232, %p233
    %p235 = scmp.ne.s32.totalorder %s224, %s225
    %p236 = scmp.eq.s32.totalorder %s22, 0
    %p237 = por %p235, %p236
    %p238 = scmp.ne.s32.totalorder %s224, %s225
    %p239 = scmp.eq.s32.totalorder %s23, 3
    %p240 = por %p238, %p239
    %p242 = scmp.ne.s32.totalorder %s225, %s241
    %p243 = scmp.eq.s32.totalorder %s23, 0
    %p244 = por %p242, %p243
    %p245 = scmp.le.s32.totalorder 1, %s17
    %p246 = scmp.lt.s32.totalorder %s17, 5
    %p247 = pnand %p245, %p246
    %p248 = pneg %p247
    // Predicated region
    $region9: #{tpu_custom_call.1} parent=5 // pred_check
      _
    $region10: #{tpu_custom_call.1} parent=5 // pred_check_branch
      %250 = sbr.rel (%p247) target = $region12
    $region11: #{tpu_custom_call.1} parent=5 // pred_region
      %s251 = ssub.s32 %s17, 1
      // Predicated region
      $region13: #{tpu_custom_call.1} parent=11 // pred_check
        %p252 = pneg %p64
      $region14: #{tpu_custom_call.1} parent=11 // pred_check_branch
        %254 = sbr.rel (%p252) target = $region16
      $region15: #{tpu_custom_call.1} parent=11 // pred_region
        _
      $region16: #{tpu_custom_call.1} parent=11 // pred_fallthru
        _
      // Predicated region
      $region17: #{tpu_custom_call.1} parent=11 // pred_check
        %p255 = pneg %p85
      $region18: #{tpu_custom_call.1} parent=11 // pred_check_branch
        %257 = sbr.rel (%p255) target = $region20
      $region19: #{tpu_custom_call.1} parent=11 // pred_region
        _
      $region20: #{tpu_custom_call.1} parent=11 // pred_fallthru
        _
      // Predicated region
      $region21: #{tpu_custom_call.1} parent=11 // pred_check
        %p258 = pneg %p106
      $region22: #{tpu_custom_call.1} parent=11 // pred_check_branch
        %260 = sbr.rel (%p258) target = $region24
      $region23: #{tpu_custom_call.1} parent=11 // pred_region
        _
      $region24: #{tpu_custom_call.1} parent=11 // pred_fallthru
        _
      // Predicated region
      $region25: #{tpu_custom_call.1} parent=11 // pred_check
        %p261 = pneg %p127
      $region26: #{tpu_custom_call.1} parent=11 // pred_check_branch
        %263 = sbr.rel (%p261) target = $region28
      $region27: #{tpu_custom_call.1} parent=11 // pred_region
        _
      $region28: #{tpu_custom_call.1} parent=11 // pred_fallthru
        _
      // Predicated region
      $region29: #{tpu_custom_call.1} parent=11 // pred_check
        %p264 = pneg %p148
      $region30: #{tpu_custom_call.1} parent=11 // pred_check_branch
        %266 = sbr.rel (%p264) target = $region32
      $region31: #{tpu_custom_call.1} parent=11 // pred_region
        _
      $region32: #{tpu_custom_call.1} parent=11 // pred_fallthru
        _
      // Predicated region
      $region33: #{tpu_custom_call.1} parent=11 // pred_check
        %p267 = pneg %p169
      $region34: #{tpu_custom_call.1} parent=11 // pred_check_branch
        %269 = sbr.rel (%p267) target = $region36
      $region35: #{tpu_custom_call.1} parent=11 // pred_region
        _
      $region36: #{tpu_custom_call.1} parent=11 // pred_fallthru
        _
      // Predicated region
      $region37: #{tpu_custom_call.1} parent=11 // pred_check
        %p270 = pneg %p190
      $region38: #{tpu_custom_call.1} parent=11 // pred_check_branch
        %272 = sbr.rel (%p270) target = $region40
      $region39: #{tpu_custom_call.1} parent=11 // pred_region
        _
      $region40: #{tpu_custom_call.1} parent=11 // pred_fallthru
        _
      // Predicated region
      $region41: #{tpu_custom_call.1} parent=11 // pred_check
        %p273 = pneg %p211
      $region42: #{tpu_custom_call.1} parent=11 // pred_check_branch
        %275 = sbr.rel (%p273) target = $region44
      $region43: #{tpu_custom_call.1} parent=11 // pred_region
        _
      $region44: #{tpu_custom_call.1} parent=11 // pred_fallthru
        _
    $region12: #{tpu_custom_call.1} parent=5 // pred_fallthru
      _
    %p276 = scmp.lt.s32.totalorder %s17, 4
    // Predicated region
    $region45: #{tpu_custom_call.1} parent=5 // pred_check
      %p277 = pneg %p276
    $region46: #{tpu_custom_call.1} parent=5 // pred_check_branch
      %279 = sbr.rel (%p277) target = $region48
    $region47: #{tpu_custom_call.1} parent=5 // pred_region
      // Predicated region
      $region49: #{tpu_custom_call.1} parent=47 // pred_check
        %p280 = pneg %p37
      $region50: #{tpu_custom_call.1} parent=47 // pred_check_branch
        %282 = sbr.rel (%p280) target = $region52
      $region51: #{tpu_custom_call.1} parent=47 // pred_region
        %s283 = smul.u32 2, %s17
        %p284 = scmp.lt.s32.totalorder %s283, 7
        %s285 = scalar_select %p284, %s283, 7
        %s286 = smul.addr %s285, 8
        %s287 = scalar_lea.vmem %s0, %s286
        %s288 = smul.u32 2, %s17
      $region52: #{tpu_custom_call.1} parent=47 // pred_fallthru
        _
    $region48: #{tpu_custom_call.1} parent=5 // pred_fallthru
      _
    %p289 = scmp.le.s32.totalorder 1, %s17
    %p290 = scmp.lt.s32.totalorder %s17, 5
    %p291 = pnand %p289, %p290
    %p292 = pneg %p291
    // Predicated region
    $region53: #{tpu_custom_call.1} parent=5 // pred_check
      _
    $region54: #{tpu_custom_call.1} parent=5 // pred_check_branch
      %294 = sbr.rel (%p291) target = $region56
    $region55: #{tpu_custom_call.1} parent=5 // pred_region
      %s295 = ssub.s32 %s17, 1
      %s296 = smul.u32 2, %s22
      %p297 = scmp.lt.s32.totalorder %s296, 7
      %s298 = scalar_select %p297, %s296, 7
      %s299 = smul.addr %s298, 8
      %s300 = scalar_lea.vmem %s0, %s299
      %p301 = pneg %p43
      %p302 = pneg %p40
      %p303 = pneg %p64
      %p304 = pneg %p61
      %p305 = pneg %p85
      %p306 = pneg %p82
      %p307 = pneg %p106
      %p308 = pneg %p103
      %p309 = pneg %p127
      %p310 = pneg %p124
      %p311 = pneg %p148
      %p312 = pneg %p145
      %p313 = pneg %p169
      %p314 = pneg %p166
      %p315 = pneg %p190
      %p316 = pneg %p187
      %p317 = pneg %p211
      %p318 = pneg %p208
      %p319 = pneg %p237
      %p320 = pneg %p234
      %s321 = smul.u32 2, %s22
      %p322 = scmp.lt.s32.totalorder %s321, 7
      %s323 = scalar_select %p322, %s321, 7
      %s324 = smul.addr %s323, 8
      %s325 = scalar_lea.vmem %s9, %s324
      %s326 = smul.u32 2, %s22
      %p327 = scmp.lt.s32.totalorder %s326, 7
      %s328 = scalar_select %p327, %s326, 7
      %s329 = smul.addr %s328, 8
      %s330 = scalar_lea.vmem %s0, %s329
      %s331 = smul.u32 2, %s22
      %s332 = smul.u32 2, %s22
      %p333 = scmp.lt.s32.totalorder %s332, 7
      %s334 = scalar_select %p333, %s332, 7
      %s335 = smul.addr %s334, 8
      %s336 = scalar_lea.vmem %s9, %s335
      %s337 = smul.u32 2, %s22
      %v338 = vld [vmem:[%s330] sm:$0xff]
      %v339 = vld [vmem:[%s330 + $0x8] sm:$0xff]
      %v340 = vld [vmem:[%s1] sm:$0xff]
      %v341 = vld [vmem:[%s1 + $0x8] sm:$0xff]
      %v342 = vld [vmem:[%s1 + $0x10] sm:$0xff]
      %v343 = vld [vmem:[%s1 + $0x18] sm:$0xff]
      %v344 = vld [vmem:[%s2] sm:$0x1]
      %v346 = vperm.slane %v344, 0
      %vm348 = vcmask 261120
      %v350 = vsel %vm348, %v338, 0
      %v353 = vsel %vm348, %v339, 0
      %355 = vmatpush.msra.mxu0 0.0
      %356 = vmatpush.msra.mxu0 0.0
      %357 = vmatpush.msra.mxu0 0.0
      %358 = vmatpush.msra.mxu0 0.0
      %359 = vmatpush.msra.mxu0 0.0
      %360 = vmatpush.msra.mxu0 0.0
      %361 = vmatpush.msra.mxu0 0.0
      %362 = vmatpush.msra.mxu0 0.0
      %363 = vmatpush.msra.mxu0 0.0
      %364 = vmatpush.msra.mxu0 0.0
      %365 = vmatpush.msra.mxu0 0.0
      %366 = vmatpush.msra.mxu0 0.0
      %367 = vmatpush.msra.mxu0 %v343
      %368 = vmatpush.msra.mxu0 %v342
      %369 = vmatpush.msra.mxu0 %v341
      %370 = vmatpush.msra.mxu0 %v340
      %371 = vmatmul.f32.gmra.mxu0 %v350
      %v372 = vpop.f32.mrf.mxu0
      %v373 = vadd.f32 %v346, %v372
      %374 = vmatmul.f32.gmra.mxu0 %v353
      %v375 = vpop.f32.mrf.mxu0
      %v376 = vadd.f32 %v346, %v375
      %377 = vdwg.mxu0
      %v378 = vmax.f32 %v373, 0.0
      %v379 = vmax.f32 %v376, 0.0
      %v380 = vld [vmem:[%s3] sm:$0xff]
      %v381 = vld [vmem:[%s3 + $0x8] sm:$0xff]
      %v382 = vld [vmem:[%s3 + $0x10] sm:$0xff]
      %v383 = vld [vmem:[%s3 + $0x18] sm:$0xff]
      %v384 = vld [vmem:[%s3 + $0x20] sm:$0xff]
      %v385 = vld [vmem:[%s3 + $0x28] sm:$0xff]
      %v386 = vld [vmem:[%s3 + $0x30] sm:$0xff]
      %v387 = vld [vmem:[%s3 + $0x38] sm:$0xff]
      %v388 = vld [vmem:[%s4] sm:$0x1]
      %v390 = vperm.slane %v388, 0
      %vm392 = vcmask 523264
      %v394 = vsel %vm392, %v378, 0
      %v397 = vsel %vm392, %v379, 0
      %399 = vmatpush.msra.mxu0 0.0
      %400 = vmatpush.msra.mxu0 0.0
      %401 = vmatpush.msra.mxu0 0.0
      %402 = vmatpush.msra.mxu0 0.0
      %403 = vmatpush.msra.mxu0 0.0
      %404 = vmatpush.msra.mxu0 0.0
      %405 = vmatpush.msra.mxu0 0.0
      %406 = vmatpush.msra.mxu0 0.0
      %407 = vmatpush.msra.mxu0 %v387
      %408 = vmatpush.msra.mxu0 %v386
      %409 = vmatpush.msra.mxu0 %v385
      %410 = vmatpush.msra.mxu0 %v384
      %411 = vmatpush.msra.mxu0 %v383
      %412 = vmatpush.msra.mxu0 %v382
      %413 = vmatpush.msra.mxu0 %v381
      %414 = vmatpush.msra.mxu0 %v380
      %415 = vmatmul.f32.gmra.mxu0 %v394
      %v416 = vpop.f32.mrf.mxu0
      %v417 = vadd.f32 %v390, %v416
      %418 = vmatmul.f32.gmra.mxu0 %v397
      %v419 = vpop.f32.mrf.mxu0
      %v420 = vadd.f32 %v390, %v419
      %421 = vdwg.mxu0
      %v422 = vmax.f32 %v417, 0.0
      %v423 = vmax.f32 %v420, 0.0
      %v424 = vld [vmem:[%s5] sm:$0xff]
      %v425 = vld [vmem:[%s5 + $0x8] sm:$0xff]
      %v426 = vld [vmem:[%s5 + $0x10] sm:$0xff]
      %v427 = vld [vmem:[%s5 + $0x18] sm:$0xff]
      %v428 = vld [vmem:[%s6] sm:$0x1]
      %v430 = vperm.slane %v428, 0
      %v433 = vsel %vm348, %v422, 0
      %v436 = vsel %vm348, %v423, 0
      %438 = vmatpush.msra.mxu0 0.0
      %439 = vmatpush.msra.mxu0 0.0
      %440 = vmatpush.msra.mxu0 0.0
      %441 = vmatpush.msra.mxu0 0.0
      %442 = vmatpush.msra.mxu0 0.0
      %443 = vmatpush.msra.mxu0 0.0
      %444 = vmatpush.msra.mxu0 0.0
      %445 = vmatpush.msra.mxu0 0.0
      %446 = vmatpush.msra.mxu0 0.0
      %447 = vmatpush.msra.mxu0 0.0
      %448 = vmatpush.msra.mxu0 0.0
      %449 = vmatpush.msra.mxu0 0.0
      %450 = vmatpush.msra.mxu0 %v427
      %451 = vmatpush.msra.mxu0 %v426
      %452 = vmatpush.msra.mxu0 %v425
      %453 = vmatpush.msra.mxu0 %v424
      %454 = vmatmul.f32.gmra.mxu0 %v433
      %v455 = vpop.f32.mrf.mxu0
      %v456 = vadd.f32 %v430, %v455
      %457 = vmatmul.f32.gmra.mxu0 %v436
      %v458 = vpop.f32.mrf.mxu0
      %v459 = vadd.f32 %v430, %v458
      %460 = vdwg.mxu0
      %v461 = vmax.f32 %v456, 0.0
      %v462 = vmax.f32 %v459, 0.0
      %v463 = vld [vmem:[%s7] sm:$0xff]
      %v464 = vld [vmem:[%s7 + $0x8] sm:$0xff]
      %v465 = vld [vmem:[#allocation2] sm:$0x1]
      %v467 = vperm.slane %v465, 0
      %vm469 = vcmask 130048
      %v471 = vsel %vm469, %v461, 0
      %v474 = vsel %vm469, %v462, 0
      %476 = vmatpush.msra.mxu0 0.0
      %477 = vmatpush.msra.mxu0 0.0
      %478 = vmatpush.msra.mxu0 0.0
      %479 = vmatpush.msra.mxu0 0.0
      %480 = vmatpush.msra.mxu0 0.0
      %481 = vmatpush.msra.mxu0 0.0
      %482 = vmatpush.msra.mxu0 0.0
      %483 = vmatpush.msra.mxu0 0.0
      %484 = vmatpush.msra.mxu0 0.0
      %485 = vmatpush.msra.mxu0 0.0
      %486 = vmatpush.msra.mxu0 0.0
      %487 = vmatpush.msra.mxu0 0.0
      %488 = vmatpush.msra.mxu0 0.0
      %489 = vmatpush.msra.mxu0 0.0
      %490 = vmatpush.msra.mxu0 %v464
      %491 = vmatpush.msra.mxu0 %v463
      %492 = vmatmul.f32.gmra.mxu0 %v471
      %v493 = vpop.f32.mrf.mxu0
      %v494 = vadd.f32 %v467, %v493
      %495 = vmatmul.f32.gmra.mxu0 %v474
      %v496 = vpop.f32.mrf.mxu0
      %v497 = vadd.f32 %v467, %v496
      %498 = vdwg.mxu0
      %v499 = vxor.u32 %v494, 2147483648
      %v500 = vxor.u32 %v497, 2147483648
      %v501 = vmul.f32 %v499, 1.442695
      %v502 = vpow.pop %v501
      %v503 = vmul.f32 %v500, 1.442695
      %v504 = vpow.pop %v503
      %v505 = vadd.f32 %v502, 1.0
      %v506 = vadd.f32 %v504, 1.0
      %v507 = vrcp.pop %v505
      %v508 = vmul.f32 %v505, %v507
      %v509 = vsub.f32 1.0, %v508
      %v510 = vmul.f32 %v507, %v509
      %v511 = vadd.f32 %v507, %v510
      %vm512 = vweird.f32 %v505
      %vm513 = vweird.f32 %v507
      %vm514 = vmor %vm512, %vm513
      %v515 = vsel %vm514, %v507, %v511
      %v516 = vand.u32 2147483647, %v505
      %vm517 = vcmp.eq.f32.partialorder %v516, 8.507059e+37
      %v518 = vand.u32 %v505, 2147483648
      %v519 = vor.u32 1.1754944e-38, %v518
      %v520 = vsel %vm517, %v519, %v515
      %v521 = vmul.f32 1.0, %v520
      %v522 = vrcp.pop %v506
      %v523 = vmul.f32 %v506, %v522
      %v524 = vsub.f32 1.0, %v523
      %v525 = vmul.f32 %v522, %v524
      %v526 = vadd.f32 %v522, %v525
      %vm527 = vweird.f32 %v506
      %vm528 = vweird.f32 %v522
      %vm529 = vmor %vm527, %vm528
      %v530 = vsel %vm529, %v522, %v526
      %v531 = vand.u32 2147483647, %v506
      %vm532 = vcmp.eq.f32.partialorder %v531, 8.507059e+37
      %v533 = vand.u32 %v506, 2147483648
      %v534 = vor.u32 1.1754944e-38, %v533
      %v535 = vsel %vm532, %v534, %v530
      %v536 = vmul.f32 1.0, %v535
      %vm537 = vcmask 7168
      %538 = vst.msk [vmem:[%s336] sm:$0xff] %vm537, %v521
      %539 = vst.msk [vmem:[%s336 + $0x8] sm:$0xff] %vm537, %v536
      %s540 = smul.u32 2, %s22
      %p541 = scmp.lt.s32.totalorder %s540, 7
      %s542 = scalar_select %p541, %s540, 7
      %s543 = smul.addr %s542, 8
      %s544 = scalar_lea.vmem %s9, %s543
      // Predicated region
      $region57: #{tpu_custom_call.1} parent=55 // pred_check
        %p545 = pneg %p234
      $region58: #{tpu_custom_call.1} parent=55 // pred_check_branch
        %547 = sbr.rel (%p545) target = $region60
      $region59: #{tpu_custom_call.1} parent=55 // pred_region
        %s548 = smul.u32 2, %s22
      $region60: #{tpu_custom_call.1} parent=55 // pred_fallthru
        _
    $region56: #{tpu_custom_call.1} parent=5 // pred_fallthru
      _
    %p549 = scmp.le.s32.totalorder 2, %s17
    // Predicated region
    $region61: #{tpu_custom_call.1} parent=5 // pred_check
      %p550 = pneg %p549
    $region62: #{tpu_custom_call.1} parent=5 // pred_check_branch
      %552 = sbr.rel (%p550) target = $region64
    $region63: #{tpu_custom_call.1} parent=5 // pred_region
      %s553 = ssub.s32 %s17, 2
      // Predicated region
      $region65: #{tpu_custom_call.1} parent=63 // pred_check
        %p554 = pneg %p240
      $region66: #{tpu_custom_call.1} parent=63 // pred_check_branch
        %556 = sbr.rel (%p554) target = $region68
      $region67: #{tpu_custom_call.1} parent=63 // pred_region
        %s557 = smul.u32 2, %s23
        %p558 = scmp.lt.s32.totalorder %s557, 7
        %s559 = scalar_select %p558, %s557, 7
        %s560 = smul.addr %s559, 8
        %s561 = scalar_lea.vmem %s9, %s560
      $region68: #{tpu_custom_call.1} parent=63 // pred_fallthru
        _
    $region64: #{tpu_custom_call.1} parent=5 // pred_fallthru
      _
  $region6: #{tpu_custom_call.1} parent=0 // loop_footer
    %s21 = sadd.s32 1, %s17
  $region7: #{tpu_custom_call.1} parent=0 // loop_footer_branch
    %16 = sbr.rel target = $region3
  $region8: #{tpu_custom_call.1} parent=0 // loop_exit
    _

</llo_original>
